<compile_context>
chip_gen: v7x
topology: tpu7x:2x2x1
jax: 0.10.0
libtpu: 0.0.40
codegen_flags: <defaults>
</compile_context>

<pallas_src>
import jax
import jax.numpy as jnp
from jax.experimental import pallas as pl
from jax.experimental.pallas import tpu as pltpu


def _round_up(v, m):
    return ((v + m - 1) // m) * m


# ---------------------------------------------------------------------------
# Specialized kernel for out_size == 1 (module default).
# ---------------------------------------------------------------------------
def _mlp_out1_kernel(x_ref, w1_ref, b1_ref, w2row_ref, b2_ref, o_ref):
    x = x_ref[...]                                              # (TB, IN_P)
    h = jnp.dot(x, w1_ref[...],
                preferred_element_type=jnp.float32)             # (TB, HID_P)   MXU
    h = jnp.maximum(h + b1_ref[...], 0.0)                       # bias + ReLU   VPU
    # Second linear (hidden -> 1): VPU multiply + cross-lane reduce instead of a
    # (TB,H)@(H,1) matmul that would waste 127/128 MXU output columns.
    y = jnp.sum(h * w2row_ref[...], axis=-1, keepdims=True)     # (TB, 1)       VPU + XLU
    y = y + b2_ref[0, 0]                                        # scalar bias from SMEM
    # Lane-dense store: broadcast across 128 lanes (unmasked vst); wrapper slices col 0.
    o_ref[...] = jnp.broadcast_to(y, o_ref.shape).astype(o_ref.dtype)


# ---------------------------------------------------------------------------
# General kernel (out_size > 1): both linears on the MXU, lane-dense output.
# ---------------------------------------------------------------------------
def _mlp_kernel(x_ref, w1_ref, b1_ref, w2_ref, b2_ref, o_ref):
    x = x_ref[...]                                              # (TB, IN_P)
    h = jnp.dot(x, w1_ref[...], preferred_element_type=jnp.float32)
    h = jnp.maximum(h + b1_ref[...], 0.0)
    y = jnp.dot(h, w2_ref[...], preferred_element_type=jnp.float32) + b2_ref[...]
    o_ref[...] = y.astype(o_ref.dtype)


def neural_network_forward(x, w1, b1, w2, b2):
    """x: (B, in_size); w1: (in_size, hidden); b1: (1, hidden) or (hidden,);
    w2: (hidden, out_size); b2: (1, out_size) or (out_size,). Returns (B, out_size)."""
    B, in_size = x.shape
    hidden = w1.shape[1]
    out_size = w2.shape[1]
    dtype = x.dtype

    # --- zero-pad to MXU/vreg-friendly shapes (exact; see header comment) ---
    IN_P = _round_up(in_size, 128)     # contraction dim lane-dense
    HID_P = _round_up(hidden, 128)     # 1000 -> 1024: unmasked lanes on the (B, hidden) tile
    B_P = _round_up(B, 8)              # sublane alignment
    TB = min(256, B_P)                 # batch tile: pipelines x / out when B grows
    B_P = _round_up(B_P, TB)

    xp = jnp.zeros((B_P, IN_P), dtype).at[:B, :in_size].set(x)
    w1p = jnp.zeros((IN_P, HID_P), dtype).at[:in_size, :hidden].set(w1)
    b1p = jnp.zeros((1, HID_P), dtype).at[:, :hidden].set(b1.reshape(1, hidden))

    grid = (B_P // TB,)
    compiler_params = pltpu.CompilerParams(
        # Batch axis is embarrassingly parallel -> shards across TensorCores on v7x.
        dimension_semantics=("parallel",))

    if out_size == 1:
        OUT_P = 128                                            # lane-dense output block
        w2row = jnp.zeros((1, HID_P), dtype).at[:, :hidden].set(
            w2.reshape(hidden, 1).T)                           # (1, HID_P)
        b2s = b2.reshape(1, 1)                                 # scalar -> SMEM

        out_p = pl.pallas_call(
            _mlp_out1_kernel,
            out_shape=jax.ShapeDtypeStruct((B_P, OUT_P), dtype),
            grid_spec=pltpu.PrefetchScalarGridSpec(
                num_scalar_prefetch=0,
                grid=grid,
                in_specs=[
                    pl.BlockSpec((TB, IN_P), lambda i: (i, 0)),       # x (batch-tiled)
                    pl.BlockSpec((IN_P, HID_P), lambda i: (0, 0)),    # w1 (resident)
                    pl.BlockSpec((1, HID_P), lambda i: (0, 0)),       # b1 (resident)
                    pl.BlockSpec((1, HID_P), lambda i: (0, 0)),       # w2 row (resident)
                    pl.BlockSpec(memory_space=pltpu.MemorySpace.SMEM),  # b2 scalar, no VMEM DMA
                ],
                out_specs=pl.BlockSpec((TB, OUT_P), lambda i: (i, 0)),
            ),
            compiler_params=compiler_params,
        )(xp, w1p, b1p, w2row, b2s)
        return out_p[:B, :1]

    # --- general out_size path: pad N to a multiple of 128, second matmul on MXU ---
    OUT_P = _round_up(out_size, 128)
    w2p = jnp.zeros((HID_P, OUT_P), dtype).at[:hidden, :out_size].set(w2)
    b2p = jnp.zeros((1, OUT_P), dtype).at[:, :out_size].set(b2.reshape(1, out_size))

    out_p = pl.pallas_call(
        _mlp_kernel,
        out_shape=jax.ShapeDtypeStruct((B_P, OUT_P), dtype),
        grid_spec=pltpu.PrefetchScalarGridSpec(
            num_scalar_prefetch=0,
            grid=grid,
            in_specs=[
                pl.BlockSpec((TB, IN_P), lambda i: (i, 0)),
                pl.BlockSpec((IN_P, HID_P), lambda i: (0, 0)),
                pl.BlockSpec((1, HID_P), lambda i: (0, 0)),
                pl.BlockSpec((HID_P, OUT_P), lambda i: (0, 0)),
                pl.BlockSpec((1, OUT_P), lambda i: (0, 0)),
            ],
            out_specs=pl.BlockSpec((TB, OUT_P), lambda i: (i, 0)),
        ),
        compiler_params=compiler_params,
    )(xp, w1p, b1p, w2p, b2p)
    return out_p[:B, :out_size]


if __name__ == "__main__":
    # Module defaults: in_size=50, hidden_size=1000, out_size=1
    in_size, hidden_size, out_size = 50, 1000, 1
    batch = 8

    key = jax.random.PRNGKey(0)
    kx, kw1, kb1, kw2, kb2 = jax.random.split(key, 5)

    # Deterministic parameter init (uniform, PyTorch-Linear-like scaling).
    bound1 = 1.0 / (in_size ** 0.5)
    bound2 = 1.0 / (hidden_size ** 0.5)
    x = jax.random.normal(kx, (batch, in_size), dtype=jnp.float32)
    w1 = jax.random.uniform(kw1, (in_size, hidden_size), jnp.float32, -bound1, bound1)
    b1 = jax.random.uniform(kb1, (1, hidden_size), jnp.float32, -bound1, bound1)
    w2 = jax.random.uniform(kw2, (hidden_size, out_size), jnp.float32, -bound2, bound2)
    b2 = jax.random.uniform(kb2, (1, out_size), jnp.float32, -bound2, bound2)

    out = neural_network_forward(x, w1, b1, w2, b2)
    jax.block_until_ready(out)

    # Reference check in plain JAX (unpadded math).
    ref = jnp.maximum(x @ w1 + b1, 0.0) @ w2 + b2
    assert out.shape == (batch, out_size)
    assert jnp.allclose(out, ref, atol=1e-4, rtol=1e-4)

    print("KERNEL_OK")
</pallas_src>

<mosaic_0001>
module attributes {stable_mosaic.version = 11 : i64} {
  func.func @_mlp_out1_kernel(%arg0: i32, %arg1: memref<8x128xf32, #tpu.memory_space<vmem>>, %arg2: memref<128x1024xf32, #tpu.memory_space<vmem>>, %arg3: memref<1x1024xf32, #tpu.memory_space<vmem>>, %arg4: memref<1x1024xf32, #tpu.memory_space<vmem>>, %arg5: memref<1x1xf32, #tpu.memory_space<smem>>, %arg6: memref<8x128xf32, #tpu.memory_space<vmem>>) attributes {dimension_semantics = [#tpu.dimension_semantics<parallel>], iteration_bounds = array<i64: 1>, scalar_prefetch = 0 : i64, scratch_operands = 0 : i64, tpu.core_type = #tpu.core_type<tc>, window_params = [{transform_indices = @transform_0, window_bounds = array<i64: 8, 128>}, {pipeline_mode = #tpu.pipeline_mode<synchronous>, transform_indices = @transform_1, window_bounds = array<i64: 128, 1024>}, {pipeline_mode = #tpu.pipeline_mode<synchronous>, transform_indices = @transform_2, window_bounds = array<i64: 1, 1024>}, {pipeline_mode = #tpu.pipeline_mode<synchronous>, transform_indices = @transform_3, window_bounds = array<i64: 1, 1024>}, {transform_indices = @transform_4, window_bounds = array<i64: 1, 1>}, {transform_indices = @transform_5, window_bounds = array<i64: 8, 128>}]} {
    %c0 = arith.constant 0 : index
    %c0_0 = arith.constant 0 : index
    %0 = vector.load %arg1[%c0, %c0_0] : memref<8x128xf32, #tpu.memory_space<vmem>>, vector<8x128xf32>
    %c0_1 = arith.constant 0 : index
    %c0_2 = arith.constant 0 : index
    %1 = vector.load %arg2[%c0_1, %c0_2] : memref<128x1024xf32, #tpu.memory_space<vmem>>, vector<128x1024xf32>
    %cst = arith.constant dense<0.000000e+00> : vector<8x1024xf32>
    %2 = tpu.matmul %0, %1, %cst {dimension_numbers = #tpu.dot_dimension_numbers<[1], [0], [0], [1], [0, 0, 1, 1], [], []>} : vector<8x128xf32>, vector<128x1024xf32>, vector<8x1024xf32> -> vector<8x1024xf32>
    %c0_3 = arith.constant 0 : index
    %c0_4 = arith.constant 0 : index
    %3 = vector.load %arg3[%c0_3, %c0_4] : memref<1x1024xf32, #tpu.memory_space<vmem>>, vector<1x1024xf32>
    %4 = vector.broadcast %3 : vector<1x1024xf32> to vector<8x1024xf32>
    %5 = arith.addf %2, %4 : vector<8x1024xf32>
    %cst_5 = arith.constant 0.000000e+00 : f32
    %6 = vector.broadcast %cst_5 : f32 to vector<8x1024xf32>
    %7 = arith.maximumf %5, %6 : vector<8x1024xf32>
    %c0_6 = arith.constant 0 : index
    %c0_7 = arith.constant 0 : index
    %8 = vector.load %arg4[%c0_6, %c0_7] : memref<1x1024xf32, #tpu.memory_space<vmem>>, vector<1x1024xf32>
    %9 = vector.broadcast %8 : vector<1x1024xf32> to vector<8x1024xf32>
    %10 = arith.mulf %7, %9 : vector<8x1024xf32>
    %cst_8 = arith.constant dense<0.000000e+00> : vector<8xf32>
    %11 = vector.multi_reduction <add>, %10, %cst_8 [1] : vector<8x1024xf32> to vector<8xf32>
    %12 = vector.shape_cast %11 : vector<8xf32> to vector<8x1xf32>
    %c0_9 = arith.constant 0 : index
    %c0_10 = arith.constant 0 : index
    %13 = memref.load %arg5[%c0_9, %c0_10] : memref<1x1xf32, #tpu.memory_space<smem>>
    %14 = vector.broadcast %13 : f32 to vector<8x1xf32>
    %15 = arith.addf %12, %14 : vector<8x1xf32>
    %16 = vector.shape_cast %15 : vector<8x1xf32> to vector<8x1xf32>
    %17 = vector.broadcast %16 : vector<8x1xf32> to vector<8x128xf32>
    %c0_11 = arith.constant 0 : index
    %c0_12 = arith.constant 0 : index
    %18 = vector.load %arg6[%c0_11, %c0_12] : memref<8x128xf32, #tpu.memory_space<vmem>>, vector<8x128xf32>
    tpu.vector_store %arg6[%c0_11, %c0_12], %17 {strides = array<i32>} : memref<8x128xf32, #tpu.memory_space<vmem>>, vector<8x128xf32>,
    return
  }
  func.func @transform_0(%arg0: i32) -> (i32, i32) {
    %c0_i32 = arith.constant 0 : i32
    %c0_i32_0 = arith.constant 0 : i32
    return %arg0, %c0_i32 : i32, i32
  }
  func.func @transform_1(%arg0: i32) -> (i32, i32) {
    %c0_i32 = arith.constant 0 : i32
    %c0_i32_0 = arith.constant 0 : i32
    %c0_i32_1 = arith.constant 0 : i32
    return %c0_i32, %c0_i32_0 : i32, i32
  }
  func.func @transform_2(%arg0: i32) -> (i32, i32) {
    %c0_i32 = arith.constant 0 : i32
    %c0_i32_0 = arith.constant 0 : i32
    %c0_i32_1 = arith.constant 0 : i32
    return %c0_i32, %c0_i32_0 : i32, i32
  }
  func.func @transform_3(%arg0: i32) -> (i32, i32) {
    %c0_i32 = arith.constant 0 : i32
    %c0_i32_0 = arith.constant 0 : i32
    %c0_i32_1 = arith.constant 0 : i32
    return %c0_i32, %c0_i32_0 : i32, i32
  }
  func.func @transform_4(%arg0: i32) -> (i32, i32) {
    %c0_i32 = arith.constant 0 : i32
    %c0_i32_0 = arith.constant 0 : i32
    %c0_i32_1 = arith.constant 0 : i32
    return %c0_i32, %c0_i32_0 : i32, i32
  }
  func.func @transform_5(%arg0: i32) -> (i32, i32) {
    %c0_i32 = arith.constant 0 : i32
    %c0_i32_0 = arith.constant 0 : i32
    return %arg0, %c0_i32 : i32, i32
  }
}

</mosaic_0001>

<llo_original>
// kernel: tpu_custom_call.1
$region0: #{tpu_custom_call.1}
  #allocation0 [shape = 'u32[]', space=smem, size = 0x4, offset = 0x4, fixed_abs, tag = 'smem constant byte address 0x4 - core index']
  #allocation1 [shape = 'u32[144,128]{1,0:T(1,128)}', space=vmem, size = 0x12000, scoped, tag = 'internal scratch']
  #allocation2 [shape = 'f32[1,1]{1,0:T(1,128)S(6)}', space=smem, size = 0x200, scoped, tag = 'scoped memory for tpu_custom_call.1']
  %s0 = inlined_call_operand.hbm [shape: f32[8,128], index: 0, kind: input, shape index: {}]
  %s1 = inlined_call_operand.hbm [shape: f32[128,1024], index: 1, kind: input, shape index: {}]
  %s2 = inlined_call_operand.vmem [shape: f32[1,1024], index: 2, kind: input, shape index: {}]
  %s3 = inlined_call_operand.hbm [shape: f32[1,1024], index: 3, kind: input, shape index: {}]
  %s4 = inlined_call_operand.<no memory space> [shape: f32[1,1], index: 4, kind: input, shape index: {}]
  %s5 = inlined_call_operand.hbm [shape: f32[8,128], index: 5, kind: output, shape index: {}]
  %s6 = sld [smem:[#allocation0]]
  $region42: #{tpu_custom_call.1} parent=0
    _
  %s8 = ssub.s32 1, %s6
  %s9 = scalar_select 0, %s8, %s6
  %10 = sst [smem:[#allocation2]] %s4
  $region1: #{tpu_custom_call.1} parent=0
    #allocation3 [shape = 'u8[4096]{0}', space=vmem, size = 0x1000, scoped, tag = 'input window, operand 0, single buffered']
    #allocation4 [shape = 's32[1]{0}', space=sflag, size = 0x4, scoped, tag = 'scoped memory for tpu_custom_call.1']
    #allocation5 [shape = 's32[1]{0}', space=sflag, size = 0x4, scoped, tag = 'scoped memory for tpu_custom_call.1']
    #allocation6 [shape = 'u8[524288]{0}', space=vmem, size = 0x80000, scoped, tag = 'input window, operand 1, single buffered']
    #allocation7 [shape = 's32[1]{0}', space=sflag, size = 0x4, scoped, tag = 'scoped memory for tpu_custom_call.1']
    #allocation8 [shape = 'u8[4096]{0}', space=vmem, size = 0x1000, scoped, tag = 'input window, operand 3, single buffered']
    #allocation9 [shape = 'u8[4096]{0}', space=vmem, size = 0x1000, scoped, tag = 'output window, operand 0, single buffered']
    %11 = vsyncpa [#allocation4], 0
    %12 = vsyncpa [#allocation7], 0
    %13 = vsyncpa [#allocation5], 0
    // Predicated region
    $region2: #{tpu_custom_call.1} parent=1 // pred_check
      _
    $region3: #{tpu_custom_call.1} parent=1 // pred_check_branch
      %15 = sbr.rel (0) target = $region5
    $region4: #{tpu_custom_call.1} parent=1 // pred_region
      %s17 = ssub.s32 128, 128
      %18 = vsyncadd [#allocation4], %s17
      %s20 = sshll.u32 [#allocation3], 4
      %s21 = int_to_ptr.vmem [resolvable:$true] %s20
      %23 = dma.hbm_to_vmem [thread:$0]  %s0, 128, %s21, [#allocation4]
    $region5: #{tpu_custom_call.1} parent=1 // pred_fallthru
      _
    // Predicated region
    $region6: #{tpu_custom_call.1} parent=1 // pred_check
      _
    $region7: #{tpu_custom_call.1} parent=1 // pred_check_branch
      %25 = sbr.rel (0) target = $region9
    $region8: #{tpu_custom_call.1} parent=1 // pred_region
      %s27 = ssub.s32 16384, 16384
      %28 = vsyncadd [#allocation7], %s27
      %s29 = sshll.u32 [#allocation6], 4
      %s30 = int_to_ptr.vmem [resolvable:$true] %s29
      %35 = dma.hbm_to_vmem [thread:$0]  %s1, 16384, %s30, [#allocation7], 1024, 1024, 64
    $region9: #{tpu_custom_call.1} parent=1 // pred_fallthru
      _
    // Predicated region
    $region10: #{tpu_custom_call.1} parent=1 // pred_check
      _
    $region11: #{tpu_custom_call.1} parent=1 // pred_check_branch
      %37 = sbr.rel (0) target = $region13
    $region12: #{tpu_custom_call.1} parent=1 // pred_region
      _
    $region13: #{tpu_custom_call.1} parent=1 // pred_fallthru
      _
    // Predicated region
    $region14: #{tpu_custom_call.1} parent=1 // pred_check
      _
    $region15: #{tpu_custom_call.1} parent=1 // pred_check_branch
      %39 = sbr.rel (0) target = $region17
    $region16: #{tpu_custom_call.1} parent=1 // pred_region
      %s41 = ssub.s32 128, 128
      %42 = vsyncadd [#allocation7], %s41
      %s44 = sshll.u32 [#allocation8], 4
      %s45 = int_to_ptr.vmem [resolvable:$true] %s44
      %47 = dma.hbm_to_vmem [thread:$0]  %s3, 128, %s45, [#allocation7]
    $region17: #{tpu_custom_call.1} parent=1 // pred_fallthru
      _
    // Predicated region
    $region18: #{tpu_custom_call.1} parent=1 // pred_check
      _
    $region19: #{tpu_custom_call.1} parent=1 // pred_check_branch
      %49 = sbr.rel (0) target = $region21
    $region20: #{tpu_custom_call.1} parent=1 // pred_region
      _
    $region21: #{tpu_custom_call.1} parent=1 // pred_fallthru
      _
    // Predicated region
    $region22: #{tpu_custom_call.1} parent=1 // pred_check
      _
    $region23: #{tpu_custom_call.1} parent=1 // pred_check_branch
      %51 = sbr.rel (0) target = $region25
    $region24: #{tpu_custom_call.1} parent=1 // pred_region
      %52 = dma.done [#allocation4], 128
    $region25: #{tpu_custom_call.1} parent=1 // pred_fallthru
      _
    // Predicated region
    $region26: #{tpu_custom_call.1} parent=1 // pred_check
      _
    $region27: #{tpu_custom_call.1} parent=1 // pred_check_branch
      %54 = sbr.rel (0) target = $region29
    $region28: #{tpu_custom_call.1} parent=1 // pred_region
      %55 = dma.done [#allocation7], 16384
    $region29: #{tpu_custom_call.1} parent=1 // pred_fallthru
      _
    // Predicated region
    $region30: #{tpu_custom_call.1} parent=1 // pred_check
      _
    $region31: #{tpu_custom_call.1} parent=1 // pred_check_branch
      %57 = sbr.rel (0) target = $region33
    $region32: #{tpu_custom_call.1} parent=1 // pred_region
      %58 = dma.done [#allocation7], 128
    $region33: #{tpu_custom_call.1} parent=1 // pred_fallthru
      _
    %v59 = vld [vmem:[#allocation3] sm:$0xff]
    %v60 = vld [vmem:[#allocation6] sm:$0xff]
    %v61 = vld [vmem:[#allocation6 + $0x8] sm:$0xff]
    %v62 = vld [vmem:[#allocation6 + $0x10] sm:$0xff]
    %v63 = vld [vmem:[#allocation6 + $0x18] sm:$0xff]
    %v64 = vld [vmem:[#allocation6 + $0x20] sm:$0xff]
    %v65 = vld [vmem:[#allocation6 + $0x28] sm:$0xff]
    %v66 = vld [vmem:[#allocation6 + $0x30] sm:$0xff]
    %v67 = vld [vmem:[#allocation6 + $0x38] sm:$0xff]
    %v68 = vld [vmem:[#allocation6 + $0x40] sm:$0xff]
    %v69 = vld [vmem:[#allocation6 + $0x48] sm:$0xff]
    %v70 = vld [vmem:[#allocation6 + $0x50] sm:$0xff]
    %v71 = vld [vmem:[#allocation6 + $0x58] sm:$0xff]
    %v72 = vld [vmem:[#allocation6 + $0x60] sm:$0xff]
    %v73 = vld [vmem:[#allocation6 + $0x68] sm:$0xff]
    %v74 = vld [vmem:[#allocation6 + $0x70] sm:$0xff]
    %v75 = vld [vmem:[#allocation6 + $0x78] sm:$0xff]
    %v76 = vld [vmem:[#allocation6 + $0x80] sm:$0xff]
    %v77 = vld [vmem:[#allocation6 + $0x88] sm:$0xff]
    %v78 = vld [vmem:[#allocation6 + $0x90] sm:$0xff]
    %v79 = vld [vmem:[#allocation6 + $0x98] sm:$0xff]
    %v80 = vld [vmem:[#allocation6 + $0xa0] sm:$0xff]
    %v81 = vld [vmem:[#allocation6 + $0xa8] sm:$0xff]
    %v82 = vld [vmem:[#allocation6 + $0xb0] sm:$0xff]
    %v83 = vld [vmem:[#allocation6 + $0xb8] sm:$0xff]
    %v84 = vld [vmem:[#allocation6 + $0xc0] sm:$0xff]
    %v85 = vld [vmem:[#allocation6 + $0xc8] sm:$0xff]
    %v86 = vld [vmem:[#allocation6 + $0xd0] sm:$0xff]
    %v87 = vld [vmem:[#allocation6 + $0xd8] sm:$0xff]
    %v88 = vld [vmem:[#allocation6 + $0xe0] sm:$0xff]
    %v89 = vld [vmem:[#allocation6 + $0xe8] sm:$0xff]
    %v90 = vld [vmem:[#allocation6 + $0xf0] sm:$0xff]
    %v91 = vld [vmem:[#allocation6 + $0xf8] sm:$0xff]
    %v92 = vld [vmem:[#allocation6 + $0x100] sm:$0xff]
    %v93 = vld [vmem:[#allocation6 + $0x108] sm:$0xff]
    %v94 = vld [vmem:[#allocation6 + $0x110] sm:$0xff]
    %v95 = vld [vmem:[#allocation6 + $0x118] sm:$0xff]
    %v96 = vld [vmem:[#allocation6 + $0x120] sm:$0xff]
    %v97 = vld [vmem:[#allocation6 + $0x128] sm:$0xff]
    %v98 = vld [vmem:[#allocation6 + $0x130] sm:$0xff]
    %v99 = vld [vmem:[#allocation6 + $0x138] sm:$0xff]
    %v100 = vld [vmem:[#allocation6 + $0x140] sm:$0xff]
    %v101 = vld [vmem:[#allocation6 + $0x148] sm:$0xff]
    %v102 = vld [vmem:[#allocation6 + $0x150] sm:$0xff]
    %v103 = vld [vmem:[#allocation6 + $0x158] sm:$0xff]
    %v104 = vld [vmem:[#allocation6 + $0x160] sm:$0xff]
    %v105 = vld [vmem:[#allocation6 + $0x168] sm:$0xff]
    %v106 = vld [vmem:[#allocation6 + $0x170] sm:$0xff]
    %v107 = vld [vmem:[#allocation6 + $0x178] sm:$0xff]
    %v108 = vld [vmem:[#allocation6 + $0x180] sm:$0xff]
    %v109 = vld [vmem:[#allocation6 + $0x188] sm:$0xff]
    %v110 = vld [vmem:[#allocation6 + $0x190] sm:$0xff]
    %v111 = vld [vmem:[#allocation6 + $0x198] sm:$0xff]
    %v112 = vld [vmem:[#allocation6 + $0x1a0] sm:$0xff]
    %v113 = vld [vmem:[#allocation6 + $0x1a8] sm:$0xff]
    %v114 = vld [vmem:[#allocation6 + $0x1b0] sm:$0xff]
    %v115 = vld [vmem:[#allocation6 + $0x1b8] sm:$0xff]
    %v116 = vld [vmem:[#allocation6 + $0x1c0] sm:$0xff]
    %v117 = vld [vmem:[#allocation6 + $0x1c8] sm:$0xff]
    %v118 = vld [vmem:[#allocation6 + $0x1d0] sm:$0xff]
    %v119 = vld [vmem:[#allocation6 + $0x1d8] sm:$0xff]
    %v120 = vld [vmem:[#allocation6 + $0x1e0] sm:$0xff]
    %v121 = vld [vmem:[#allocation6 + $0x1e8] sm:$0xff]
    %v122 = vld [vmem:[#allocation6 + $0x1f0] sm:$0xff]
    %v123 = vld [vmem:[#allocation6 + $0x1f8] sm:$0xff]
    %v124 = vld [vmem:[#allocation6 + $0x200] sm:$0xff]
    %v125 = vld [vmem:[#allocation6 + $0x208] sm:$0xff]
    %v126 = vld [vmem:[#allocation6 + $0x210] sm:$0xff]
    %v127 = vld [vmem:[#allocation6 + $0x218] sm:$0xff]
    %v128 = vld [vmem:[#allocation6 + $0x220] sm:$0xff]
    %v129 = vld [vmem:[#allocation6 + $0x228] sm:$0xff]
    %v130 = vld [vmem:[#allocation6 + $0x230] sm:$0xff]
    %v131 = vld [vmem:[#allocation6 + $0x238] sm:$0xff]
    %v132 = vld [vmem:[#allocation6 + $0x240] sm:$0xff]
    %v133 = vld [vmem:[#allocation6 + $0x248] sm:$0xff]
    %v134 = vld [vmem:[#allocation6 + $0x250] sm:$0xff]
    %v135 = vld [vmem:[#allocation6 + $0x258] sm:$0xff]
    %v136 = vld [vmem:[#allocation6 + $0x260] sm:$0xff]
    %v137 = vld [vmem:[#allocation6 + $0x268] sm:$0xff]
    %v138 = vld [vmem:[#allocation6 + $0x270] sm:$0xff]
    %v139 = vld [vmem:[#allocation6 + $0x278] sm:$0xff]
    %v140 = vld [vmem:[#allocation6 + $0x280] sm:$0xff]
    %v141 = vld [vmem:[#allocation6 + $0x288] sm:$0xff]
    %v142 = vld [vmem:[#allocation6 + $0x290] sm:$0xff]
    %v143 = vld [vmem:[#allocation6 + $0x298] sm:$0xff]
    %v144 = vld [vmem:[#allocation6 + $0x2a0] sm:$0xff]
    %v145 = vld [vmem:[#allocation6 + $0x2a8] sm:$0xff]
    %v146 = vld [vmem:[#allocation6 + $0x2b0] sm:$0xff]
    %v147 = vld [vmem:[#allocation6 + $0x2b8] sm:$0xff]
    %v148 = vld [vmem:[#allocation6 + $0x2c0] sm:$0xff]
    %v149 = vld [vmem:[#allocation6 + $0x2c8] sm:$0xff]
    %v150 = vld [vmem:[#allocation6 + $0x2d0] sm:$0xff]
    %v151 = vld [vmem:[#allocation6 + $0x2d8] sm:$0xff]
    %v152 = vld [vmem:[#allocation6 + $0x2e0] sm:$0xff]
    %v153 = vld [vmem:[#allocation6 + $0x2e8] sm:$0xff]
    %v154 = vld [vmem:[#allocation6 + $0x2f0] sm:$0xff]
    %v155 = vld [vmem:[#allocation6 + $0x2f8] sm:$0xff]
    %v156 = vld [vmem:[#allocation6 + $0x300] sm:$0xff]
    %v157 = vld [vmem:[#allocation6 + $0x308] sm:$0xff]
    %v158 = vld [vmem:[#allocation6 + $0x310] sm:$0xff]
    %v159 = vld [vmem:[#allocation6 + $0x318] sm:$0xff]
    %v160 = vld [vmem:[#allocation6 + $0x320] sm:$0xff]
    %v161 = vld [vmem:[#allocation6 + $0x328] sm:$0xff]
    %v162 = vld [vmem:[#allocation6 + $0x330] sm:$0xff]
    %v163 = vld [vmem:[#allocation6 + $0x338] sm:$0xff]
    %v164 = vld [vmem:[#allocation6 + $0x340] sm:$0xff]
    %v165 = vld [vmem:[#allocation6 + $0x348] sm:$0xff]
    %v166 = vld [vmem:[#allocation6 + $0x350] sm:$0xff]
    %v167 = vld [vmem:[#allocation6 + $0x358] sm:$0xff]
    %v168 = vld [vmem:[#allocation6 + $0x360] sm:$0xff]
    %v169 = vld [vmem:[#allocation6 + $0x368] sm:$0xff]
    %v170 = vld [vmem:[#allocation6 + $0x370] sm:$0xff]
    %v171 = vld [vmem:[#allocation6 + $0x378] sm:$0xff]
    %v172 = vld [vmem:[#allocation6 + $0x380] sm:$0xff]
    %v173 = vld [vmem:[#allocation6 + $0x388] sm:$0xff]
    %v174 = vld [vmem:[#allocation6 + $0x390] sm:$0xff]
    %v175 = vld [vmem:[#allocation6 + $0x398] sm:$0xff]
    %v176 = vld [vmem:[#allocation6 + $0x3a0] sm:$0xff]
    %v177 = vld [vmem:[#allocation6 + $0x3a8] sm:$0xff]
    %v178 = vld [vmem:[#allocation6 + $0x3b0] sm:$0xff]
    %v179 = vld [vmem:[#allocation6 + $0x3b8] sm:$0xff]
    %v180 = vld [vmem:[#allocation6 + $0x3c0] sm:$0xff]
    %v181 = vld [vmem:[#allocation6 + $0x3c8] sm:$0xff]
    %v182 = vld [vmem:[#allocation6 + $0x3d0] sm:$0xff]
    %v183 = vld [vmem:[#allocation6 + $0x3d8] sm:$0xff]
    %v184 = vld [vmem:[#allocation6 + $0x3e0] sm:$0xff]
    %v185 = vld [vmem:[#allocation6 + $0x3e8] sm:$0xff]
    %v186 = vld [vmem:[#allocation6 + $0x3f0] sm:$0xff]
    %v187 = vld [vmem:[#allocation6 + $0x3f8] sm:$0xff]
    %v188 = vld [vmem:[%s2] sm:$0xff]
    %v190 = vlaneseq
    %v191 = vshrl.u32 %v190, 7
    %v192 = vsub.s32 0, %v191
    %v193 = vrot.slane %v188, %v192
    %v194 = vlaneseq
    %v195 = vshrl.u32 %v194, 7
    %v196 = vsub.s32 1, %v195
    %v197 = vrot.slane %v188, %v196
    %v198 = vlaneseq
    %v199 = vshrl.u32 %v198, 7
    %v200 = vsub.s32 2, %v199
    %v201 = vrot.slane %v188, %v200
    %v202 = vlaneseq
    %v203 = vshrl.u32 %v202, 7
    %v204 = vsub.s32 3, %v203
    %v205 = vrot.slane %v188, %v204
    %v206 = vlaneseq
    %v207 = vshrl.u32 %v206, 7
    %v208 = vsub.s32 4, %v207
    %v209 = vrot.slane %v188, %v208
    %v210 = vlaneseq
    %v211 = vshrl.u32 %v210, 7
    %v212 = vsub.s32 5, %v211
    %v213 = vrot.slane %v188, %v212
    %v214 = vlaneseq
    %v215 = vshrl.u32 %v214, 7
    %v216 = vsub.s32 6, %v215
    %v217 = vrot.slane %v188, %v216
    %v218 = vlaneseq
    %v219 = vshrl.u32 %v218, 7
    %v220 = vsub.s32 7, %v219
    %v221 = vrot.slane %v188, %v220
    %230 = vmatprep.subr.mxu0 %v61
    %231 = vmatpush1.msra.mxu0 %v60
    %232 = vmatprep.subr.mxu0 %v69
    %233 = vmatpush1.msra.mxu0 %v68
    %234 = vmatprep.subr.mxu0 %v77
    %235 = vmatpush1.msra.mxu0 %v76
    %236 = vmatprep.subr.mxu0 %v85
    %237 = vmatpush1.msra.mxu0 %v84
    %238 = vmatprep.subr.mxu0 %v93
    %239 = vmatpush1.msra.mxu0 %v92
    %240 = vmatprep.subr.mxu0 %v101
    %241 = vmatpush1.msra.mxu0 %v100
    %242 = vmatprep.subr.mxu0 %v109
    %243 = vmatpush1.msra.mxu0 %v108
    %244 = vmatprep.subr.mxu0 %v117
    %245 = vmatpush1.msra.mxu0 %v116
    %246 = vmatprep.subr.mxu0 %v125
    %247 = vmatpush1.msra.mxu0 %v124
    %248 = vmatprep.subr.mxu0 %v133
    %249 = vmatpush1.msra.mxu0 %v132
    %250 = vmatprep.subr.mxu0 %v141
    %251 = vmatpush1.msra.mxu0 %v140
    %252 = vmatprep.subr.mxu0 %v149
    %253 = vmatpush1.msra.mxu0 %v148
    %254 = vmatprep.subr.mxu0 %v157
    %255 = vmatpush1.msra.mxu0 %v156
    %256 = vmatprep.subr.mxu0 %v165
    %257 = vmatpush1.msra.mxu0 %v164
    %258 = vmatprep.subr.mxu0 %v173
    %259 = vmatpush1.msra.mxu0 %v172
    %260 = vmatprep.subr.mxu0 %v181
    %261 = vmatpush1.msra.mxu0 %v180
    %262 = vmatprep.subr.mxu0 0.0
    %263 = vmatpush1.msra.mxu0 0.0
    %264 = vmatprep.subr.mxu0 0.0
    %265 = vmatpush1.msra.mxu0 0.0
    %266 = vmatprep.subr.mxu0 0.0
    %267 = vmatpush1.msra.mxu0 0.0
    %268 = vmatprep.subr.mxu0 0.0
    %269 = vmatpush1.msra.mxu0 0.0
    %270 = vmatprep.subr.mxu0 0.0
    %271 = vmatpush1.msra.mxu0 0.0
    %272 = vmatprep.subr.mxu0 0.0
    %273 = vmatpush1.msra.mxu0 0.0
    %274 = vmatprep.subr.mxu0 0.0
    %275 = vmatpush1.msra.mxu0 0.0
    %276 = vmatprep.subr.mxu0 0.0
    %277 = vmatpush1.msra.mxu0 0.0
    %278 = vmatprep.subr.mxu0 0.0
    %279 = vmatpush1.msra.mxu0 0.0
    %280 = vmatprep.subr.mxu0 0.0
    %281 = vmatpush1.msra.mxu0 0.0
    %282 = vmatprep.subr.mxu0 0.0
    %283 = vmatpush1.msra.mxu0 0.0
    %284 = vmatprep.subr.mxu0 0.0
    %285 = vmatpush1.msra.mxu0 0.0
    %286 = vmatprep.subr.mxu0 0.0
    %287 = vmatpush1.msra.mxu0 0.0
    %288 = vmatprep.subr.mxu0 0.0
    %289 = vmatpush1.msra.mxu0 0.0
    %290 = vmatprep.subr.mxu0 0.0
    %291 = vmatpush1.msra.mxu0 0.0
    %292 = vmatprep.subr.mxu0 0.0
    %293 = vmatpush1.msra.mxu0 0.0
    %294 = vmatprep.mubr.f32.mxu0 0.0
    %295 = vmatmul.mubr.f32.gmra.mrb[0].mxu0 %v59
    %v296 = vpop.f32.mrb[0].mxu0
    %v297 = vadd.f32 %v193, %v296
    %v298 = vpop.f32.mrb[0].mxu0
    %v299 = vadd.f32 %v197, %v298
    %300 = vdwg.mxu0
    %301 = vmatprep.subr.mxu0 %v63
    %302 = vmatpush1.msra.mxu0 %v62
    %303 = vmatprep.subr.mxu0 %v71
    %304 = vmatpush1.msra.mxu0 %v70
    %305 = vmatprep.subr.mxu0 %v79
    %306 = vmatpush1.msra.mxu0 %v78
    %307 = vmatprep.subr.mxu0 %v87
    %308 = vmatpush1.msra.mxu0 %v86
    %309 = vmatprep.subr.mxu0 %v95
    %310 = vmatpush1.msra.mxu0 %v94
    %311 = vmatprep.subr.mxu0 %v103
    %312 = vmatpush1.msra.mxu0 %v102
    %313 = vmatprep.subr.mxu0 %v111
    %314 = vmatpush1.msra.mxu0 %v110
    %315 = vmatprep.subr.mxu0 %v119
    %316 = vmatpush1.msra.mxu0 %v118
    %317 = vmatprep.subr.mxu0 %v127
    %318 = vmatpush1.msra.mxu0 %v126
    %319 = vmatprep.subr.mxu0 %v135
    %320 = vmatpush1.msra.mxu0 %v134
    %321 = vmatprep.subr.mxu0 %v143
    %322 = vmatpush1.msra.mxu0 %v142
    %323 = vmatprep.subr.mxu0 %v151
    %324 = vmatpush1.msra.mxu0 %v150
    %325 = vmatprep.subr.mxu0 %v159
    %326 = vmatpush1.msra.mxu0 %v158
    %327 = vmatprep.subr.mxu0 %v167
    %328 = vmatpush1.msra.mxu0 %v166
    %329 = vmatprep.subr.mxu0 %v175
    %330 = vmatpush1.msra.mxu0 %v174
    %331 = vmatprep.subr.mxu0 %v183
    %332 = vmatpush1.msra.mxu0 %v182
    %333 = vmatprep.subr.mxu0 0.0
    %334 = vmatpush1.msra.mxu0 0.0
    %335 = vmatprep.subr.mxu0 0.0
    %336 = vmatpush1.msra.mxu0 0.0
    %337 = vmatprep.subr.mxu0 0.0
    %338 = vmatpush1.msra.mxu0 0.0
    %339 = vmatprep.subr.mxu0 0.0
    %340 = vmatpush1.msra.mxu0 0.0
    %341 = vmatprep.subr.mxu0 0.0
    %342 = vmatpush1.msra.mxu0 0.0
    %343 = vmatprep.subr.mxu0 0.0
    %344 = vmatpush1.msra.mxu0 0.0
    %345 = vmatprep.subr.mxu0 0.0
    %346 = vmatpush1.msra.mxu0 0.0
    %347 = vmatprep.subr.mxu0 0.0
    %348 = vmatpush1.msra.mxu0 0.0
    %349 = vmatprep.subr.mxu0 0.0
    %350 = vmatpush1.msra.mxu0 0.0
    %351 = vmatprep.subr.mxu0 0.0
    %352 = vmatpush1.msra.mxu0 0.0
    %353 = vmatprep.subr.mxu0 0.0
    %354 = vmatpush1.msra.mxu0 0.0
    %355 = vmatprep.subr.mxu0 0.0
    %356 = vmatpush1.msra.mxu0 0.0
    %357 = vmatprep.subr.mxu0 0.0
    %358 = vmatpush1.msra.mxu0 0.0
    %359 = vmatprep.subr.mxu0 0.0
    %360 = vmatpush1.msra.mxu0 0.0
    %361 = vmatprep.subr.mxu0 0.0
    %362 = vmatpush1.msra.mxu0 0.0
    %363 = vmatprep.subr.mxu0 0.0
    %364 = vmatpush1.msra.mxu0 0.0
    %365 = vmatprep.mubr.f32.mxu0 0.0
    %366 = vmatmul.mubr.f32.gmra.mrb[0].mxu0 %v59
    %v367 = vpop.f32.mrb[0].mxu0
    %v368 = vadd.f32 %v201, %v367
    %v369 = vpop.f32.mrb[0].mxu0
    %v370 = vadd.f32 %v205, %v369
    %371 = vdwg.mxu0
    %372 = vmatprep.subr.mxu0 %v65
    %373 = vmatpush1.msra.mxu0 %v64
    %374 = vmatprep.subr.mxu0 %v73
    %375 = vmatpush1.msra.mxu0 %v72
    %376 = vmatprep.subr.mxu0 %v81
    %377 = vmatpush1.msra.mxu0 %v80
    %378 = vmatprep.subr.mxu0 %v89
    %379 = vmatpush1.msra.mxu0 %v88
    %380 = vmatprep.subr.mxu0 %v97
    %381 = vmatpush1.msra.mxu0 %v96
    %382 = vmatprep.subr.mxu0 %v105
    %383 = vmatpush1.msra.mxu0 %v104
    %384 = vmatprep.subr.mxu0 %v113
    %385 = vmatpush1.msra.mxu0 %v112
    %386 = vmatprep.subr.mxu0 %v121
    %387 = vmatpush1.msra.mxu0 %v120
    %388 = vmatprep.subr.mxu0 %v129
    %389 = vmatpush1.msra.mxu0 %v128
    %390 = vmatprep.subr.mxu0 %v137
    %391 = vmatpush1.msra.mxu0 %v136
    %392 = vmatprep.subr.mxu0 %v145
    %393 = vmatpush1.msra.mxu0 %v144
    %394 = vmatprep.subr.mxu0 %v153
    %395 = vmatpush1.msra.mxu0 %v152
    %396 = vmatprep.subr.mxu0 %v161
    %397 = vmatpush1.msra.mxu0 %v160
    %398 = vmatprep.subr.mxu0 %v169
    %399 = vmatpush1.msra.mxu0 %v168
    %400 = vmatprep.subr.mxu0 %v177
    %401 = vmatpush1.msra.mxu0 %v176
    %402 = vmatprep.subr.mxu0 %v185
    %403 = vmatpush1.msra.mxu0 %v184
    %404 = vmatprep.subr.mxu0 0.0
    %405 = vmatpush1.msra.mxu0 0.0
    %406 = vmatprep.subr.mxu0 0.0
    %407 = vmatpush1.msra.mxu0 0.0
    %408 = vmatprep.subr.mxu0 0.0
    %409 = vmatpush1.msra.mxu0 0.0
    %410 = vmatprep.subr.mxu0 0.0
    %411 = vmatpush1.msra.mxu0 0.0
    %412 = vmatprep.subr.mxu0 0.0
    %413 = vmatpush1.msra.mxu0 0.0
    %414 = vmatprep.subr.mxu0 0.0
    %415 = vmatpush1.msra.mxu0 0.0
    %416 = vmatprep.subr.mxu0 0.0
    %417 = vmatpush1.msra.mxu0 0.0
    %418 = vmatprep.subr.mxu0 0.0
    %419 = vmatpush1.msra.mxu0 0.0
    %420 = vmatprep.subr.mxu0 0.0
    %421 = vmatpush1.msra.mxu0 0.0
    %422 = vmatprep.subr.mxu0 0.0
    %423 = vmatpush1.msra.mxu0 0.0
    %424 = vmatprep.subr.mxu0 0.0
    %425 = vmatpush1.msra.mxu0 0.0
    %426 = vmatprep.subr.mxu0 0.0
    %427 = vmatpush1.msra.mxu0 0.0
    %428 = vmatprep.subr.mxu0 0.0
    %429 = vmatpush1.msra.mxu0 0.0
    %430 = vmatprep.subr.mxu0 0.0
    %431 = vmatpush1.msra.mxu0 0.0
    %432 = vmatprep.subr.mxu0 0.0
    %433 = vmatpush1.msra.mxu0 0.0
    %434 = vmatprep.subr.mxu0 0.0
    %435 = vmatpush1.msra.mxu0 0.0
    %436 = vmatprep.mubr.f32.mxu0 0.0
    %437 = vmatmul.mubr.f32.gmra.mrb[0].mxu0 %v59
    %v438 = vpop.f32.mrb[0].mxu0
    %v439 = vadd.f32 %v209, %v438
    %v440 = vpop.f32.mrb[0].mxu0
    %v441 = vadd.f32 %v213, %v440
    %442 = vdwg.mxu0
    %443 = vmatprep.subr.mxu0 %v67
    %444 = vmatpush1.msra.mxu0 %v66
    %445 = vmatprep.subr.mxu0 %v75
    %446 = vmatpush1.msra.mxu0 %v74
    %447 = vmatprep.subr.mxu0 %v83
    %448 = vmatpush1.msra.mxu0 %v82
    %449 = vmatprep.subr.mxu0 %v91
    %450 = vmatpush1.msra.mxu0 %v90
    %451 = vmatprep.subr.mxu0 %v99
    %452 = vmatpush1.msra.mxu0 %v98
    %453 = vmatprep.subr.mxu0 %v107
    %454 = vmatpush1.msra.mxu0 %v106
    %455 = vmatprep.subr.mxu0 %v115
    %456 = vmatpush1.msra.mxu0 %v114
    %457 = vmatprep.subr.mxu0 %v123
    %458 = vmatpush1.msra.mxu0 %v122
    %459 = vmatprep.subr.mxu0 %v131
    %460 = vmatpush1.msra.mxu0 %v130
    %461 = vmatprep.subr.mxu0 %v139
    %462 = vmatpush1.msra.mxu0 %v138
    %463 = vmatprep.subr.mxu0 %v147
    %464 = vmatpush1.msra.mxu0 %v146
    %465 = vmatprep.subr.mxu0 %v155
    %466 = vmatpush1.msra.mxu0 %v154
    %467 = vmatprep.subr.mxu0 %v163
    %468 = vmatpush1.msra.mxu0 %v162
    %469 = vmatprep.subr.mxu0 %v171
    %470 = vmatpush1.msra.mxu0 %v170
    %471 = vmatprep.subr.mxu0 %v179
    %472 = vmatpush1.msra.mxu0 %v178
    %473 = vmatprep.subr.mxu0 %v187
    %474 = vmatpush1.msra.mxu0 %v186
    %475 = vmatprep.subr.mxu0 0.0
    %476 = vmatpush1.msra.mxu0 0.0
    %477 = vmatprep.subr.mxu0 0.0
    %478 = vmatpush1.msra.mxu0 0.0
    %479 = vmatprep.subr.mxu0 0.0
    %480 = vmatpush1.msra.mxu0 0.0
    %481 = vmatprep.subr.mxu0 0.0
    %482 = vmatpush1.msra.mxu0 0.0
    %483 = vmatprep.subr.mxu0 0.0
    %484 = vmatpush1.msra.mxu0 0.0
    %485 = vmatprep.subr.mxu0 0.0
    %486 = vmatpush1.msra.mxu0 0.0
    %487 = vmatprep.subr.mxu0 0.0
    %488 = vmatpush1.msra.mxu0 0.0
    %489 = vmatprep.subr.mxu0 0.0
    %490 = vmatpush1.msra.mxu0 0.0
    %491 = vmatprep.subr.mxu0 0.0
    %492 = vmatpush1.msra.mxu0 0.0
    %493 = vmatprep.subr.mxu0 0.0
    %494 = vmatpush1.msra.mxu0 0.0
    %495 = vmatprep.subr.mxu0 0.0
    %496 = vmatpush1.msra.mxu0 0.0
    %497 = vmatprep.subr.mxu0 0.0
    %498 = vmatpush1.msra.mxu0 0.0
    %499 = vmatprep.subr.mxu0 0.0
    %500 = vmatpush1.msra.mxu0 0.0
    %501 = vmatprep.subr.mxu0 0.0
    %502 = vmatpush1.msra.mxu0 0.0
    %503 = vmatprep.subr.mxu0 0.0
    %504 = vmatpush1.msra.mxu0 0.0
    %505 = vmatprep.subr.mxu0 0.0
    %506 = vmatpush1.msra.mxu0 0.0
    %507 = vmatprep.mubr.f32.mxu0 0.0
    %508 = vmatmul.mubr.f32.gmra.mrb[0].mxu0 %v59
    %v509 = vpop.f32.mrb[0].mxu0
    %v510 = vadd.f32 %v217, %v509
    %v511 = vpop.f32.mrb[0].mxu0
    %v512 = vadd.f32 %v221, %v511
    %513 = vdwg.mxu0
    %v514 = vmax.f32 %v297, 0.0
    %v515 = vmax.f32 %v299, 0.0
    %v516 = vmax.f32 %v368, 0.0
    %v517 = vmax.f32 %v370, 0.0
    %v518 = vmax.f32 %v439, 0.0
    %v519 = vmax.f32 %v441, 0.0
    %v520 = vmax.f32 %v510, 0.0
    %v521 = vmax.f32 %v512, 0.0
    %v522 = vld [vmem:[#allocation8] sm:$0xff]
    %v524 = vlaneseq
    %v525 = vshrl.u32 %v524, 7
    %v526 = vsub.s32 0, %v525
    %v527 = vrot.slane %v522, %v526
    %v528 = vlaneseq
    %v529 = vshrl.u32 %v528, 7
    %v530 = vsub.s32 1, %v529
    %v531 = vrot.slane %v522, %v530
    %v532 = vlaneseq
    %v533 = vshrl.u32 %v532, 7
    %v534 = vsub.s32 2, %v533
    %v535 = vrot.slane %v522, %v534
    %v536 = vlaneseq
    %v537 = vshrl.u32 %v536, 7
    %v538 = vsub.s32 3, %v537
    %v539 = vrot.slane %v522, %v538
    %v540 = vlaneseq
    %v541 = vshrl.u32 %v540, 7
    %v542 = vsub.s32 4, %v541
    %v543 = vrot.slane %v522, %v542
    %v544 = vlaneseq
    %v545 = vshrl.u32 %v544, 7
    %v546 = vsub.s32 5, %v545
    %v547 = vrot.slane %v522, %v546
    %v548 = vlaneseq
    %v549 = vshrl.u32 %v548, 7
    %v550 = vsub.s32 6, %v549
    %v551 = vrot.slane %v522, %v550
    %v552 = vlaneseq
    %v553 = vshrl.u32 %v552, 7
    %v554 = vsub.s32 7, %v553
    %v555 = vrot.slane %v522, %v554
    %v564 = vmul.f32 %v514, %v527
    %v565 = vmul.f32 %v515, %v531
    %v566 = vmul.f32 %v516, %v535
    %v567 = vmul.f32 %v517, %v539
    %v568 = vmul.f32 %v518, %v543
    %v569 = vmul.f32 %v519, %v547
    %v570 = vmul.f32 %v520, %v551
    %v571 = vmul.f32 %v521, %v555
    %v572 = vadd.f32 %v564, %v565
    %v573 = vadd.f32 %v572, %v566
    %v574 = vadd.f32 %v573, %v567
    %v575 = vadd.f32 %v574, %v568
    %v576 = vadd.f32 %v575, %v569
    %v577 = vadd.f32 %v576, %v570
    %v578 = vadd.f32 %v577, %v571
    %579 = vadd.xlane.f32.xlu0 %v578
    %v580 = vpop.xlane.xlu0 %579
    %s581 = sld [smem:[#allocation2]]
    %v582 = vstv %s581
    %v583 = vadd.f32 %v580, %v582
    %584 = vst [vmem:[#allocation9] sm:$0xff] %v583
    // Predicated region
    $region34: #{tpu_custom_call.1} parent=1 // pred_check
      _
    $region35: #{tpu_custom_call.1} parent=1 // pred_check_branch
      %586 = sbr.rel (0) target = $region37
    $region36: #{tpu_custom_call.1} parent=1 // pred_region
      %s588 = ssub.s32 128, 128
      %589 = vsyncadd [#allocation5], %s588
      %s591 = sshll.u32 [#allocation9], 4
      %s592 = int_to_ptr.vmem [resolvable:$true] %s591
      %594 = dma.vmem_to_hbm [thread:$0]  %s592, 128, %s5, [#allocation5]
    $region37: #{tpu_custom_call.1} parent=1 // pred_fallthru
      _
    // Predicated region
    $region38: #{tpu_custom_call.1} parent=1 // pred_check
      _
    $region39: #{tpu_custom_call.1} parent=1 // pred_check_branch
      %596 = sbr.rel (0) target = $region41
    $region40: #{tpu_custom_call.1} parent=1 // pred_region
      %597 = dma.done [#allocation5], 128
    $region41: #{tpu_custom_call.1} parent=1 // pred_fallthru
      _
    %598 = vsyncpa [#allocation4], 1
    %599 = vsyncpa [#allocation7], 1
    %600 = vsyncpa [#allocation5], 1

</llo_original>
